<compile_context>
chip_gen: v5e
topology: v5e:2x2
jax: 0.10.0
libtpu: 0.0.40
codegen_flags: <defaults>
</compile_context>

<pallas_src>
import math
from functools import partial

import numpy as np
import jax
import jax.numpy as jnp
from jax import lax
from jax.experimental import pallas as pl
from jax.experimental.pallas import tpu as pltpu  # noqa: F401  (TPU backend)

# ----------------------------- configuration -------------------------------
D_MODEL = 32
NHEAD = 4
DIM_FF = 64
SEQ = 8
BATCH = 2
EPS = 1e-5
# TODO(synk): dropout layers are implemented in eval mode (identity), matching
# PyTorch module.eval() semantics; training-mode stochastic dropout is omitted.


# ------------------------------ Pallas kernel -------------------------------
def encoder_layer_kernel(
    src_ref, pos_ref, bias_ref,
    wqk_ref, bqk_ref, wv_ref, bv_ref,
    wo_ref, bo_ref,
    n1w_ref, n1b_ref,
    w1_ref, b1_ref, w2_ref, b2_ref,
    n2w_ref, n2b_ref,
    o_ref,
    *, nhead, scale,
):
    src = src_ref[...]                      # (M, E) = (L*N, E), f32
    pos = pos_ref[...]                      # (M, E)
    M, E = src.shape
    Dh = E // nhead

    qk_in = src + pos                       # q = k = src + pos ; value = src

    # Fused Q/K projection (one matmul) + V projection. Weights pre-transposed
    # in the wrapper so no in-kernel `.T`.
    qk = jnp.dot(qk_in, wqk_ref[...], preferred_element_type=jnp.float32) + bqk_ref[...]  # (M, 2E)
    v = jnp.dot(src, wv_ref[...], preferred_element_type=jnp.float32) + bv_ref[...]       # (M, E)

    # Split heads onto a leading batch dim: (nhead, M, Dh).
    qh = jnp.stack([qk[:, h * Dh:(h + 1) * Dh] for h in range(nhead)], axis=0)
    kh = jnp.stack([qk[:, E + h * Dh:E + (h + 1) * Dh] for h in range(nhead)], axis=0)
    vh = jnp.stack([v[:, h * Dh:(h + 1) * Dh] for h in range(nhead)], axis=0)

    # Head-batched attention over all M rows; the additive bias (0 within a
    # batch, -1e9 across batches) keeps the folded batches independent.
    s = jnp.einsum('hqd,hkd->hqk', qh, kh, preferred_element_type=jnp.float32)  # (H, M, M)
    s = s * scale + bias_ref[...]
    s = s - jnp.max(s, axis=-1, keepdims=True)
    p = jnp.exp(s)
    # exact reciprocal: approx=True would push softmax error near the 1e-4 check
    p = p * pl.reciprocal(jnp.sum(p, axis=-1, keepdims=True), approx=False)
    ctx = jnp.einsum('hqk,hkd->hqd', p, vh, preferred_element_type=jnp.float32)  # (H, M, Dh)

    # Output projection as a per-head K-split accumulation (avoids a lane-dim
    # re-concatenate of the heads).
    attn = bo_ref[...] + jnp.dot(ctx[0], wo_ref[0], preferred_element_type=jnp.float32)
    for h in range(1, nhead):
        attn = attn + jnp.dot(ctx[h], wo_ref[h], preferred_element_type=jnp.float32)

    # residual + LayerNorm1 (post-norm)
    x = src + attn
    mu = jnp.mean(x, axis=-1, keepdims=True)
    xc = x - mu
    var = jnp.mean(xc * xc, axis=-1, keepdims=True)
    x = xc * lax.rsqrt(var + EPS) * n1w_ref[...] + n1b_ref[...]

    # feed-forward: linear1 -> relu -> linear2 (dropout = identity in eval)
    h1 = jnp.dot(x, w1_ref[...], preferred_element_type=jnp.float32) + b1_ref[...]
    h1 = jnp.maximum(h1, 0.0)
    ffn = jnp.dot(h1, w2_ref[...], preferred_element_type=jnp.float32) + b2_ref[...]

    # residual + LayerNorm2
    y = x + ffn
    mu2 = jnp.mean(y, axis=-1, keepdims=True)
    yc = y - mu2
    var2 = jnp.mean(yc * yc, axis=-1, keepdims=True)
    y = yc * lax.rsqrt(var2 + EPS) * n2w_ref[...] + n2b_ref[...]

    o_ref[...] = y.astype(o_ref.dtype)


# ------------------------------- wrapper ------------------------------------
def transformer_encoder_layer(src_lne, pos_lne, params, *, nhead=NHEAD):
    """src_lne, pos_lne: (L, N, E) float32 (PyTorch MHA convention).

    Returns (L, N, E). Single Pallas invocation: whole problem as an
    (L*N, E) slab resident in VMEM; weights re-laid-out once at trace time.
    """
    L, N, E = src_lne.shape
    M = L * N
    Dh = E // nhead

    (in_w, in_b, out_w, out_b,
     n1_w, n1_b, lin1_w, lin1_b, lin2_w, lin2_b, n2_w, n2_b) = params

    # ---- one-time weight re-layout (pre-transposed, q/k fused) -------------
    wqk_t = jnp.transpose(in_w[:2 * E])                 # (E, 2E) = [wq^T | wk^T]
    bqk = in_b[:, :2 * E]                               # (1, 2E)
    wv_t = jnp.transpose(in_w[2 * E:])                  # (E, E)
    bv = in_b[:, 2 * E:]                                # (1, E)
    wo_h = jnp.transpose(out_w).reshape(nhead, Dh, E)   # per-head K-split of out proj
    w1_t = jnp.transpose(lin1_w)                        # (E, FF)
    w2_t = jnp.transpose(lin2_w)                        # (FF, E)

    # (L, N, E) -> (L*N, E): contiguous reshape, no HBM transpose. Row r of the
    # slab belongs to batch (r % N).
    src2d = src_lne.reshape(M, E)
    pos2d = pos_lne.reshape(M, E)

    # Additive attention bias keeping the folded batches independent.
    bid = np.arange(M) % N
    bias = jnp.asarray(
        np.where(bid[:, None] == bid[None, :], 0.0, -1e9), dtype=src_lne.dtype)  # (M, M)

    out2d = pl.pallas_call(
        partial(encoder_layer_kernel, nhead=nhead, scale=1.0 / math.sqrt(Dh)),
        out_shape=jax.ShapeDtypeStruct((M, E), src_lne.dtype),
    )(src2d, pos2d, bias,
      wqk_t, bqk, wv_t, bv, wo_h, out_b,
      n1_w, n1_b, w1_t, lin1_b, w2_t, lin2_b, n2_w, n2_b)

    return out2d.reshape(L, N, E)


# --------------------------- pure-JAX reference ------------------------------
def reference(src_lne, pos_lne, params, *, nhead=NHEAD):
    (in_w, in_b, out_w, out_b,
     n1_w, n1_b, lin1_w, lin1_b, lin2_w, lin2_b, n2_w, n2_b) = params
    L, N, E = src_lne.shape
    Dh = E // nhead
    x = jnp.transpose(src_lne, (1, 0, 2))   # (N, L, E)
    p = jnp.transpose(pos_lne, (1, 0, 2))
    qk = x + p
    wq, wk, wv = in_w[:E], in_w[E:2 * E], in_w[2 * E:]
    bq, bk, bv = in_b[0, :E], in_b[0, E:2 * E], in_b[0, 2 * E:]
    q = qk @ wq.T + bq
    k = qk @ wk.T + bk
    v = x @ wv.T + bv
    qh = q.reshape(N, L, nhead, Dh).transpose(0, 2, 1, 3) / math.sqrt(Dh)
    kh = k.reshape(N, L, nhead, Dh).transpose(0, 2, 1, 3)
    vh = v.reshape(N, L, nhead, Dh).transpose(0, 2, 1, 3)
    s = jnp.einsum('nhld,nhmd->nhlm', qh, kh)
    a = jax.nn.softmax(s, axis=-1)
    o = jnp.einsum('nhlm,nhmd->nhld', a, vh).transpose(0, 2, 1, 3).reshape(N, L, E)
    attn = o @ out_w.T + out_b[0]
    y = x + attn
    mu = y.mean(-1, keepdims=True)
    var = ((y - mu) ** 2).mean(-1, keepdims=True)
    y = (y - mu) / jnp.sqrt(var + EPS) * n1_w[0] + n1_b[0]
    h = jnp.maximum(y @ lin1_w.T + lin1_b[0], 0.0)
    f = h @ lin2_w.T + lin2_b[0]
    z = y + f
    mu2 = z.mean(-1, keepdims=True)
    var2 = ((z - mu2) ** 2).mean(-1, keepdims=True)
    z = (z - mu2) / jnp.sqrt(var2 + EPS) * n2_w[0] + n2_b[0]
    return z.transpose(1, 0, 2)


# --------------------------------- main --------------------------------------
if __name__ == "__main__":
    key = jax.random.PRNGKey(0)
    ks = jax.random.split(key, 16)

    E, FF = D_MODEL, DIM_FF
    sc = 0.1
    params = (
        sc * jax.random.normal(ks[0], (3 * E, E), jnp.float32),   # in_proj_weight
        sc * jax.random.normal(ks[1], (1, 3 * E), jnp.float32),   # in_proj_bias
        sc * jax.random.normal(ks[2], (E, E), jnp.float32),       # out_proj.weight
        sc * jax.random.normal(ks[3], (1, E), jnp.float32),       # out_proj.bias
        jnp.ones((1, E), jnp.float32),                            # norm1.weight
        jnp.zeros((1, E), jnp.float32),                           # norm1.bias
        sc * jax.random.normal(ks[4], (FF, E), jnp.float32),      # linear1.weight
        sc * jax.random.normal(ks[5], (1, FF), jnp.float32),      # linear1.bias
        sc * jax.random.normal(ks[6], (E, FF), jnp.float32),      # linear2.weight
        sc * jax.random.normal(ks[7], (1, E), jnp.float32),       # linear2.bias
        jnp.ones((1, E), jnp.float32),                            # norm2.weight
        jnp.zeros((1, E), jnp.float32),                           # norm2.bias
    )

    src = jax.random.normal(ks[8], (SEQ, BATCH, E), jnp.float32)  # (L, N, E)
    pos = jax.random.normal(ks[9], (SEQ, BATCH, E), jnp.float32)  # (L, N, E)

    out = transformer_encoder_layer(src, pos, params)
    out = jax.block_until_ready(out)

    ref = jax.block_until_ready(reference(src, pos, params))
    assert out.shape == (SEQ, BATCH, E)
    assert jnp.allclose(out, ref, atol=1e-4, rtol=1e-4), \
        f"mismatch: max abs err {jnp.max(jnp.abs(out - ref))}"

    print("KERNEL_OK")
</pallas_src>

<mosaic_0001>
module attributes {stable_mosaic.version = 11 : i64} {
  func.func @encoder_layer_kernel(%arg0: memref<16x32xf32, #tpu.memory_space<vmem>>, %arg1: memref<16x32xf32, #tpu.memory_space<vmem>>, %arg2: memref<16x16xf32, #tpu.memory_space<vmem>>, %arg3: memref<32x64xf32, #tpu.memory_space<vmem>>, %arg4: memref<1x64xf32, #tpu.memory_space<vmem>>, %arg5: memref<32x32xf32, #tpu.memory_space<vmem>>, %arg6: memref<1x32xf32, #tpu.memory_space<vmem>>, %arg7: memref<4x8x32xf32, #tpu.memory_space<vmem>>, %arg8: memref<1x32xf32, #tpu.memory_space<vmem>>, %arg9: memref<1x32xf32, #tpu.memory_space<vmem>>, %arg10: memref<1x32xf32, #tpu.memory_space<vmem>>, %arg11: memref<32x64xf32, #tpu.memory_space<vmem>>, %arg12: memref<1x64xf32, #tpu.memory_space<vmem>>, %arg13: memref<64x32xf32, #tpu.memory_space<vmem>>, %arg14: memref<1x32xf32, #tpu.memory_space<vmem>>, %arg15: memref<1x32xf32, #tpu.memory_space<vmem>>, %arg16: memref<1x32xf32, #tpu.memory_space<vmem>>, %arg17: memref<16x32xf32, #tpu.memory_space<vmem>>) attributes {dimension_semantics = [], scalar_prefetch = 0 : i64, scratch_operands = 0 : i64, tpu.core_type = #tpu.core_type<tc>} {
    %c0 = arith.constant 0 : index
    %c0_0 = arith.constant 0 : index
    %0 = vector.load %arg0[%c0, %c0_0] : memref<16x32xf32, #tpu.memory_space<vmem>>, vector<16x32xf32>
    %c0_1 = arith.constant 0 : index
    %c0_2 = arith.constant 0 : index
    %1 = vector.load %arg1[%c0_1, %c0_2] : memref<16x32xf32, #tpu.memory_space<vmem>>, vector<16x32xf32>
    %2 = arith.addf %0, %1 : vector<16x32xf32>
    %c0_3 = arith.constant 0 : index
    %c0_4 = arith.constant 0 : index
    %3 = vector.load %arg3[%c0_3, %c0_4] : memref<32x64xf32, #tpu.memory_space<vmem>>, vector<32x64xf32>
    %cst = arith.constant dense<0.000000e+00> : vector<16x64xf32>
    %4 = tpu.matmul %2, %3, %cst {dimension_numbers = #tpu.dot_dimension_numbers<[1], [0], [0], [1], [0, 0, 1, 1], [], []>} : vector<16x32xf32>, vector<32x64xf32>, vector<16x64xf32> -> vector<16x64xf32>
    %c0_5 = arith.constant 0 : index
    %c0_6 = arith.constant 0 : index
    %5 = vector.load %arg4[%c0_5, %c0_6] : memref<1x64xf32, #tpu.memory_space<vmem>>, vector<1x64xf32>
    %6 = vector.broadcast %5 : vector<1x64xf32> to vector<16x64xf32>
    %7 = arith.addf %4, %6 : vector<16x64xf32>
    %c0_7 = arith.constant 0 : index
    %c0_8 = arith.constant 0 : index
    %8 = vector.load %arg5[%c0_7, %c0_8] : memref<32x32xf32, #tpu.memory_space<vmem>>, vector<32x32xf32>
    %cst_9 = arith.constant dense<0.000000e+00> : vector<16x32xf32>
    %9 = tpu.matmul %0, %8, %cst_9 {dimension_numbers = #tpu.dot_dimension_numbers<[1], [0], [0], [1], [0, 0, 1, 1], [], []>} : vector<16x32xf32>, vector<32x32xf32>, vector<16x32xf32> -> vector<16x32xf32>
    %c0_10 = arith.constant 0 : index
    %c0_11 = arith.constant 0 : index
    %10 = vector.load %arg6[%c0_10, %c0_11] : memref<1x32xf32, #tpu.memory_space<vmem>>, vector<1x32xf32>
    %11 = vector.broadcast %10 : vector<1x32xf32> to vector<16x32xf32>
    %12 = arith.addf %9, %11 : vector<16x32xf32>
    %13 = vector.extract_strided_slice %7 {offsets = [0, 0], sizes = [16, 8], strides = [1, 1]} : vector<16x64xf32> to vector<16x8xf32>
    %14 = vector.extract_strided_slice %7 {offsets = [0, 8], sizes = [16, 8], strides = [1, 1]} : vector<16x64xf32> to vector<16x8xf32>
    %15 = vector.extract_strided_slice %7 {offsets = [0, 16], sizes = [16, 8], strides = [1, 1]} : vector<16x64xf32> to vector<16x8xf32>
    %16 = vector.extract_strided_slice %7 {offsets = [0, 24], sizes = [16, 8], strides = [1, 1]} : vector<16x64xf32> to vector<16x8xf32>
    %17 = vector.shape_cast %13 : vector<16x8xf32> to vector<1x16x8xf32>
    %18 = vector.shape_cast %14 : vector<16x8xf32> to vector<1x16x8xf32>
    %19 = vector.shape_cast %15 : vector<16x8xf32> to vector<1x16x8xf32>
    %20 = vector.shape_cast %16 : vector<16x8xf32> to vector<1x16x8xf32>
    %21 = tpu.concatenate %17, %18, %19, %20 in 0 : vector<1x16x8xf32>, vector<1x16x8xf32>, vector<1x16x8xf32>, vector<1x16x8xf32> -> vector<4x16x8xf32>
    %22 = vector.extract_strided_slice %7 {offsets = [0, 32], sizes = [16, 8], strides = [1, 1]} : vector<16x64xf32> to vector<16x8xf32>
    %23 = vector.extract_strided_slice %7 {offsets = [0, 40], sizes = [16, 8], strides = [1, 1]} : vector<16x64xf32> to vector<16x8xf32>
    %24 = vector.extract_strided_slice %7 {offsets = [0, 48], sizes = [16, 8], strides = [1, 1]} : vector<16x64xf32> to vector<16x8xf32>
    %25 = vector.extract_strided_slice %7 {offsets = [0, 56], sizes = [16, 8], strides = [1, 1]} : vector<16x64xf32> to vector<16x8xf32>
    %26 = vector.shape_cast %22 : vector<16x8xf32> to vector<1x16x8xf32>
    %27 = vector.shape_cast %23 : vector<16x8xf32> to vector<1x16x8xf32>
    %28 = vector.shape_cast %24 : vector<16x8xf32> to vector<1x16x8xf32>
    %29 = vector.shape_cast %25 : vector<16x8xf32> to vector<1x16x8xf32>
    %30 = tpu.concatenate %26, %27, %28, %29 in 0 : vector<1x16x8xf32>, vector<1x16x8xf32>, vector<1x16x8xf32>, vector<1x16x8xf32> -> vector<4x16x8xf32>
    %31 = vector.extract_strided_slice %12 {offsets = [0, 0], sizes = [16, 8], strides = [1, 1]} : vector<16x32xf32> to vector<16x8xf32>
    %32 = vector.extract_strided_slice %12 {offsets = [0, 8], sizes = [16, 8], strides = [1, 1]} : vector<16x32xf32> to vector<16x8xf32>
    %33 = vector.extract_strided_slice %12 {offsets = [0, 16], sizes = [16, 8], strides = [1, 1]} : vector<16x32xf32> to vector<16x8xf32>
    %34 = vector.extract_strided_slice %12 {offsets = [0, 24], sizes = [16, 8], strides = [1, 1]} : vector<16x32xf32> to vector<16x8xf32>
    %35 = vector.shape_cast %31 : vector<16x8xf32> to vector<1x16x8xf32>
    %36 = vector.shape_cast %32 : vector<16x8xf32> to vector<1x16x8xf32>
    %37 = vector.shape_cast %33 : vector<16x8xf32> to vector<1x16x8xf32>
    %38 = vector.shape_cast %34 : vector<16x8xf32> to vector<1x16x8xf32>
    %39 = tpu.concatenate %35, %36, %37, %38 in 0 : vector<1x16x8xf32>, vector<1x16x8xf32>, vector<1x16x8xf32>, vector<1x16x8xf32> -> vector<4x16x8xf32>
    "tpu.trace_start"() <{level = 10 : i32, message = "hqd,hkd->hqk"}> : () -> ()
    %cst_12 = arith.constant dense<0.000000e+00> : vector<4x16x16xf32>
    %40 = tpu.matmul %21, %30, %cst_12 {dimension_numbers = #tpu.dot_dimension_numbers<[2], [2], [1], [1], [0, 0, 0, 1, 1, 1], [0], [0]>} : vector<4x16x8xf32>, vector<4x16x8xf32>, vector<4x16x16xf32> -> vector<4x16x16xf32>
    "tpu.trace_stop"() : () -> ()
    %cst_13 = arith.constant 0.353553385 : f32
    %41 = vector.broadcast %cst_13 : f32 to vector<4x16x16xf32>
    %42 = arith.mulf %40, %41 : vector<4x16x16xf32>
    %c0_14 = arith.constant 0 : index
    %c0_15 = arith.constant 0 : index
    %43 = vector.load %arg2[%c0_14, %c0_15] : memref<16x16xf32, #tpu.memory_space<vmem>>, vector<16x16xf32>
    %44 = vector.shape_cast %43 : vector<16x16xf32> to vector<1x16x16xf32>
    %45 = vector.broadcast %44 : vector<1x16x16xf32> to vector<4x16x16xf32>
    %46 = arith.addf %42, %45 : vector<4x16x16xf32>
    %cst_16 = arith.constant dense<0xFF800000> : vector<4x16xf32>
    %47 = vector.multi_reduction <maximumf>, %46, %cst_16 [2] : vector<4x16x16xf32> to vector<4x16xf32>
    %48 = vector.shape_cast %47 : vector<4x16xf32> to vector<4x16x1xf32>
    %49 = vector.broadcast %48 : vector<4x16x1xf32> to vector<4x16x16xf32>
    %50 = arith.subf %46, %49 : vector<4x16x16xf32>
    %51 = math.exp %50 : vector<4x16x16xf32>
    %cst_17 = arith.constant dense<0.000000e+00> : vector<4x16xf32>
    %52 = vector.multi_reduction <add>, %51, %cst_17 [2] : vector<4x16x16xf32> to vector<4x16xf32>
    %53 = vector.shape_cast %52 : vector<4x16xf32> to vector<4x16x1xf32>
    %54 = tpu.reciprocal %53 : vector<4x16x1xf32> -> vector<4x16x1xf32>
    %55 = vector.broadcast %54 : vector<4x16x1xf32> to vector<4x16x16xf32>
    %56 = arith.mulf %51, %55 : vector<4x16x16xf32>
    "tpu.trace_start"() <{level = 10 : i32, message = "hqk,hkd->hqd"}> : () -> ()
    %cst_18 = arith.constant dense<0.000000e+00> : vector<4x16x8xf32>
    %57 = tpu.matmul %56, %39, %cst_18 {dimension_numbers = #tpu.dot_dimension_numbers<[2], [1], [1], [2], [0, 0, 0, 1, 1, 2], [0], [0]>} : vector<4x16x16xf32>, vector<4x16x8xf32>, vector<4x16x8xf32> -> vector<4x16x8xf32>
    "tpu.trace_stop"() : () -> ()
    %c0_19 = arith.constant 0 : index
    %c0_20 = arith.constant 0 : index
    %58 = vector.load %arg8[%c0_19, %c0_20] : memref<1x32xf32, #tpu.memory_space<vmem>>, vector<1x32xf32>
    %59 = vector.extract_strided_slice %57 {offsets = [0, 0, 0], sizes = [1, 16, 8], strides = [1, 1, 1]} : vector<4x16x8xf32> to vector<1x16x8xf32>
    %60 = vector.shape_cast %59 : vector<1x16x8xf32> to vector<16x8xf32>
    %c0_21 = arith.constant 0 : index
    %c0_22 = arith.constant 0 : index
    %c0_23 = arith.constant 0 : index
    %61 = vector.load %arg7[%c0_21, %c0_22, %c0_23] : memref<4x8x32xf32, #tpu.memory_space<vmem>>, vector<1x8x32xf32>
    %62 = vector.shape_cast %61 : vector<1x8x32xf32> to vector<8x32xf32>
    %cst_24 = arith.constant dense<0.000000e+00> : vector<16x32xf32>
    %63 = tpu.matmul %60, %62, %cst_24 {dimension_numbers = #tpu.dot_dimension_numbers<[1], [0], [0], [1], [0, 0, 1, 1], [], []>} : vector<16x8xf32>, vector<8x32xf32>, vector<16x32xf32> -> vector<16x32xf32>
    %64 = vector.broadcast %58 : vector<1x32xf32> to vector<16x32xf32>
    %65 = arith.addf %64, %63 : vector<16x32xf32>
    %66 = vector.extract_strided_slice %57 {offsets = [1, 0, 0], sizes = [1, 16, 8], strides = [1, 1, 1]} : vector<4x16x8xf32> to vector<1x16x8xf32>
    %67 = vector.shape_cast %66 : vector<1x16x8xf32> to vector<16x8xf32>
    %c1 = arith.constant 1 : index
    %c0_25 = arith.constant 0 : index
    %c0_26 = arith.constant 0 : index
    %68 = vector.load %arg7[%c1, %c0_25, %c0_26] : memref<4x8x32xf32, #tpu.memory_space<vmem>>, vector<1x8x32xf32>
    %69 = vector.shape_cast %68 : vector<1x8x32xf32> to vector<8x32xf32>
    %cst_27 = arith.constant dense<0.000000e+00> : vector<16x32xf32>
    %70 = tpu.matmul %67, %69, %cst_27 {dimension_numbers = #tpu.dot_dimension_numbers<[1], [0], [0], [1], [0, 0, 1, 1], [], []>} : vector<16x8xf32>, vector<8x32xf32>, vector<16x32xf32> -> vector<16x32xf32>
    %71 = arith.addf %65, %70 : vector<16x32xf32>
    %72 = vector.extract_strided_slice %57 {offsets = [2, 0, 0], sizes = [1, 16, 8], strides = [1, 1, 1]} : vector<4x16x8xf32> to vector<1x16x8xf32>
    %73 = vector.shape_cast %72 : vector<1x16x8xf32> to vector<16x8xf32>
    %c2 = arith.constant 2 : index
    %c0_28 = arith.constant 0 : index
    %c0_29 = arith.constant 0 : index
    %74 = vector.load %arg7[%c2, %c0_28, %c0_29] : memref<4x8x32xf32, #tpu.memory_space<vmem>>, vector<1x8x32xf32>
    %75 = vector.shape_cast %74 : vector<1x8x32xf32> to vector<8x32xf32>
    %cst_30 = arith.constant dense<0.000000e+00> : vector<16x32xf32>
    %76 = tpu.matmul %73, %75, %cst_30 {dimension_numbers = #tpu.dot_dimension_numbers<[1], [0], [0], [1], [0, 0, 1, 1], [], []>} : vector<16x8xf32>, vector<8x32xf32>, vector<16x32xf32> -> vector<16x32xf32>
    %77 = arith.addf %71, %76 : vector<16x32xf32>
    %78 = vector.extract_strided_slice %57 {offsets = [3, 0, 0], sizes = [1, 16, 8], strides = [1, 1, 1]} : vector<4x16x8xf32> to vector<1x16x8xf32>
    %79 = vector.shape_cast %78 : vector<1x16x8xf32> to vector<16x8xf32>
    %c3 = arith.constant 3 : index
    %c0_31 = arith.constant 0 : index
    %c0_32 = arith.constant 0 : index
    %80 = vector.load %arg7[%c3, %c0_31, %c0_32] : memref<4x8x32xf32, #tpu.memory_space<vmem>>, vector<1x8x32xf32>
    %81 = vector.shape_cast %80 : vector<1x8x32xf32> to vector<8x32xf32>
    %cst_33 = arith.constant dense<0.000000e+00> : vector<16x32xf32>
    %82 = tpu.matmul %79, %81, %cst_33 {dimension_numbers = #tpu.dot_dimension_numbers<[1], [0], [0], [1], [0, 0, 1, 1], [], []>} : vector<16x8xf32>, vector<8x32xf32>, vector<16x32xf32> -> vector<16x32xf32>
    %83 = arith.addf %77, %82 : vector<16x32xf32>
    %84 = arith.addf %0, %83 : vector<16x32xf32>
    %cst_34 = arith.constant dense<0.000000e+00> : vector<16xf32>
    %85 = vector.multi_reduction <add>, %84, %cst_34 [1] : vector<16x32xf32> to vector<16xf32>
    %86 = vector.shape_cast %85 : vector<16xf32> to vector<16x1xf32>
    %cst_35 = arith.constant 3.200000e+01 : f32
    %87 = vector.broadcast %cst_35 : f32 to vector<16x1xf32>
    %88 = arith.divf %86, %87 : vector<16x1xf32>
    %89 = vector.broadcast %88 : vector<16x1xf32> to vector<16x32xf32>
    %90 = arith.subf %84, %89 : vector<16x32xf32>
    %91 = arith.mulf %90, %90 : vector<16x32xf32>
    %cst_36 = arith.constant dense<0.000000e+00> : vector<16xf32>
    %92 = vector.multi_reduction <add>, %91, %cst_36 [1] : vector<16x32xf32> to vector<16xf32>
    %93 = vector.shape_cast %92 : vector<16xf32> to vector<16x1xf32>
    %cst_37 = arith.constant 3.200000e+01 : f32
    %94 = vector.broadcast %cst_37 : f32 to vector<16x1xf32>
    %95 = arith.divf %93, %94 : vector<16x1xf32>
    %cst_38 = arith.constant 9.99999974E-6 : f32
    %96 = vector.broadcast %cst_38 : f32 to vector<16x1xf32>
    %97 = arith.addf %95, %96 : vector<16x1xf32>
    %98 = math.rsqrt %97 : vector<16x1xf32>
    %99 = vector.broadcast %98 : vector<16x1xf32> to vector<16x32xf32>
    %100 = arith.mulf %90, %99 : vector<16x32xf32>
    %c0_39 = arith.constant 0 : index
    %c0_40 = arith.constant 0 : index
    %101 = vector.load %arg9[%c0_39, %c0_40] : memref<1x32xf32, #tpu.memory_space<vmem>>, vector<1x32xf32>
    %102 = vector.broadcast %101 : vector<1x32xf32> to vector<16x32xf32>
    %103 = arith.mulf %100, %102 : vector<16x32xf32>
    %c0_41 = arith.constant 0 : index
    %c0_42 = arith.constant 0 : index
    %104 = vector.load %arg10[%c0_41, %c0_42] : memref<1x32xf32, #tpu.memory_space<vmem>>, vector<1x32xf32>
    %105 = vector.broadcast %104 : vector<1x32xf32> to vector<16x32xf32>
    %106 = arith.addf %103, %105 : vector<16x32xf32>
    %c0_43 = arith.constant 0 : index
    %c0_44 = arith.constant 0 : index
    %107 = vector.load %arg11[%c0_43, %c0_44] : memref<32x64xf32, #tpu.memory_space<vmem>>, vector<32x64xf32>
    %cst_45 = arith.constant dense<0.000000e+00> : vector<16x64xf32>
    %108 = tpu.matmul %106, %107, %cst_45 {dimension_numbers = #tpu.dot_dimension_numbers<[1], [0], [0], [1], [0, 0, 1, 1], [], []>} : vector<16x32xf32>, vector<32x64xf32>, vector<16x64xf32> -> vector<16x64xf32>
    %c0_46 = arith.constant 0 : index
    %c0_47 = arith.constant 0 : index
    %109 = vector.load %arg12[%c0_46, %c0_47] : memref<1x64xf32, #tpu.memory_space<vmem>>, vector<1x64xf32>
    %110 = vector.broadcast %109 : vector<1x64xf32> to vector<16x64xf32>
    %111 = arith.addf %108, %110 : vector<16x64xf32>
    %cst_48 = arith.constant 0.000000e+00 : f32
    %112 = vector.broadcast %cst_48 : f32 to vector<16x64xf32>
    %113 = arith.maximumf %111, %112 : vector<16x64xf32>
    %c0_49 = arith.constant 0 : index
    %c0_50 = arith.constant 0 : index
    %114 = vector.load %arg13[%c0_49, %c0_50] : memref<64x32xf32, #tpu.memory_space<vmem>>, vector<64x32xf32>
    %cst_51 = arith.constant dense<0.000000e+00> : vector<16x32xf32>
    %115 = tpu.matmul %113, %114, %cst_51 {dimension_numbers = #tpu.dot_dimension_numbers<[1], [0], [0], [1], [0, 0, 1, 1], [], []>} : vector<16x64xf32>, vector<64x32xf32>, vector<16x32xf32> -> vector<16x32xf32>
    %c0_52 = arith.constant 0 : index
    %c0_53 = arith.constant 0 : index
    %116 = vector.load %arg14[%c0_52, %c0_53] : memref<1x32xf32, #tpu.memory_space<vmem>>, vector<1x32xf32>
    %117 = vector.broadcast %116 : vector<1x32xf32> to vector<16x32xf32>
    %118 = arith.addf %115, %117 : vector<16x32xf32>
    %119 = arith.addf %106, %118 : vector<16x32xf32>
    %cst_54 = arith.constant dense<0.000000e+00> : vector<16xf32>
    %120 = vector.multi_reduction <add>, %119, %cst_54 [1] : vector<16x32xf32> to vector<16xf32>
    %121 = vector.shape_cast %120 : vector<16xf32> to vector<16x1xf32>
    %cst_55 = arith.constant 3.200000e+01 : f32
    %122 = vector.broadcast %cst_55 : f32 to vector<16x1xf32>
    %123 = arith.divf %121, %122 : vector<16x1xf32>
    %124 = vector.broadcast %123 : vector<16x1xf32> to vector<16x32xf32>
    %125 = arith.subf %119, %124 : vector<16x32xf32>
    %126 = arith.mulf %125, %125 : vector<16x32xf32>
    %cst_56 = arith.constant dense<0.000000e+00> : vector<16xf32>
    %127 = vector.multi_reduction <add>, %126, %cst_56 [1] : vector<16x32xf32> to vector<16xf32>
    %128 = vector.shape_cast %127 : vector<16xf32> to vector<16x1xf32>
    %cst_57 = arith.constant 3.200000e+01 : f32
    %129 = vector.broadcast %cst_57 : f32 to vector<16x1xf32>
    %130 = arith.divf %128, %129 : vector<16x1xf32>
    %cst_58 = arith.constant 9.99999974E-6 : f32
    %131 = vector.broadcast %cst_58 : f32 to vector<16x1xf32>
    %132 = arith.addf %130, %131 : vector<16x1xf32>
    %133 = math.rsqrt %132 : vector<16x1xf32>
    %134 = vector.broadcast %133 : vector<16x1xf32> to vector<16x32xf32>
    %135 = arith.mulf %125, %134 : vector<16x32xf32>
    %c0_59 = arith.constant 0 : index
    %c0_60 = arith.constant 0 : index
    %136 = vector.load %arg15[%c0_59, %c0_60] : memref<1x32xf32, #tpu.memory_space<vmem>>, vector<1x32xf32>
    %137 = vector.broadcast %136 : vector<1x32xf32> to vector<16x32xf32>
    %138 = arith.mulf %135, %137 : vector<16x32xf32>
    %c0_61 = arith.constant 0 : index
    %c0_62 = arith.constant 0 : index
    %139 = vector.load %arg16[%c0_61, %c0_62] : memref<1x32xf32, #tpu.memory_space<vmem>>, vector<1x32xf32>
    %140 = vector.broadcast %139 : vector<1x32xf32> to vector<16x32xf32>
    %141 = arith.addf %138, %140 : vector<16x32xf32>
    %c0_63 = arith.constant 0 : index
    %c0_64 = arith.constant 0 : index
    %142 = vector.load %arg17[%c0_63, %c0_64] : memref<16x32xf32, #tpu.memory_space<vmem>>, vector<16x32xf32>
    tpu.vector_store %arg17[%c0_63, %c0_64], %141 {strides = array<i32>} : memref<16x32xf32, #tpu.memory_space<vmem>>, vector<16x32xf32>,
    return
  }
}

</mosaic_0001>

<llo_original>
// kernel: tpu_custom_call.1
$region0: #{tpu_custom_call.1}
  #allocation0 [shape = 'u32[]', space=smem, size = 0x4, offset = 0x4, fixed_abs, tag = 'smem constant byte address 0x4 - core index']
  #allocation1 [shape = 'u32[72,128]{1,0:T(1,128)}', space=vmem, size = 0x9000, scoped, tag = 'internal scratch']
  %s0 = inlined_call_operand.hbm [shape: f32[16,32], index: 0, kind: input, shape index: {}]
  %s1 = inlined_call_operand.hbm [shape: f32[16,32], index: 1, kind: input, shape index: {}]
  %s2 = inlined_call_operand.hbm [shape: f32[16,16], index: 2, kind: input, shape index: {}]
  %s3 = inlined_call_operand.vmem [shape: f32[32,64], index: 3, kind: input, shape index: {}]
  %s4 = inlined_call_operand.vmem [shape: f32[1,64], index: 4, kind: input, shape index: {}]
  %s5 = inlined_call_operand.vmem [shape: f32[32,32], index: 5, kind: input, shape index: {}]
  %s6 = inlined_call_operand.vmem [shape: f32[1,32], index: 6, kind: input, shape index: {}]
  %s7 = inlined_call_operand.vmem [shape: f32[4,8,32], index: 7, kind: input, shape index: {}]
  %s8 = inlined_call_operand.vmem [shape: f32[1,32], index: 8, kind: input, shape index: {}]
  %s9 = inlined_call_operand.vmem [shape: f32[1,32], index: 9, kind: input, shape index: {}]
  %s10 = inlined_call_operand.vmem [shape: f32[1,32], index: 10, kind: input, shape index: {}]
  %s11 = inlined_call_operand.hbm [shape: f32[32,64], index: 11, kind: input, shape index: {}]
  %s12 = inlined_call_operand.vmem [shape: f32[1,64], index: 12, kind: input, shape index: {}]
  %s13 = inlined_call_operand.vmem [shape: f32[64,32], index: 13, kind: input, shape index: {}]
  %s14 = inlined_call_operand.vmem [shape: f32[1,32], index: 14, kind: input, shape index: {}]
  %s15 = inlined_call_operand.vmem [shape: f32[1,32], index: 15, kind: input, shape index: {}]
  %s16 = inlined_call_operand.vmem [shape: f32[1,32], index: 16, kind: input, shape index: {}]
  %s17 = inlined_call_operand.hbm [shape: f32[16,32], index: 17, kind: output, shape index: {}]
  %s18 = sld [smem:[#allocation0]]
  $region94: #{tpu_custom_call.1} parent=0
    _
  %s20 = ssub.s32 1, %s18
  %s21 = scalar_select 0, %s20, %s18
  $region1: #{tpu_custom_call.1} parent=0
    #allocation2 [shape = 'u8[8192]{0}', space=vmem, size = 0x2000, scoped, tag = 'input window, operand 0, single buffered']
    #allocation3 [shape = 's32[1]{0}', space=sflag, size = 0x4, scoped, tag = 'scoped memory for tpu_custom_call.1']
    #allocation4 [shape = 's32[1]{0}', space=sflag, size = 0x4, scoped, tag = 'scoped memory for tpu_custom_call.1']
    #allocation5 [shape = 'u8[8192]{0}', space=vmem, size = 0x2000, scoped, tag = 'input window, operand 1, single buffered']
    #allocation6 [shape = 's32[1]{0}', space=sflag, size = 0x4, scoped, tag = 'scoped memory for tpu_custom_call.1']
    #allocation7 [shape = 'u8[8192]{0}', space=vmem, size = 0x2000, scoped, tag = 'input window, operand 2, single buffered']
    #allocation8 [shape = 'u8[16384]{0}', space=vmem, size = 0x4000, scoped, tag = 'input window, operand 11, single buffered']
    #allocation9 [shape = 's32[1]{0}', space=sflag, size = 0x4, scoped, tag = 'scoped memory for tpu_custom_call.1']
    #allocation10 [shape = 'u8[8192]{0}', space=vmem, size = 0x2000, scoped, tag = 'output window, operand 0, single buffered']
    %22 = vsyncpa [#allocation3], 0
    %23 = vsyncpa [#allocation6], 0
    %24 = vsyncpa [#allocation9], 0
    %25 = vsyncpa [#allocation4], 0
    // Predicated region
    $region2: #{tpu_custom_call.1} parent=1 // pred_check
      _
    $region3: #{tpu_custom_call.1} parent=1 // pred_check_branch
      %27 = sbr.rel (0) target = $region5
    $region4: #{tpu_custom_call.1} parent=1 // pred_region
      %29 = vsyncadd [#allocation3], 0
      %s30 = sshll.u32 %s0, 4
      %s31 = int_to_ptr.hbm [resolvable:$true] %s30
      %s32 = sshll.u32 [#allocation2], 4
      %s33 = int_to_ptr.vmem [resolvable:$true] %s32
      %38 = dma.hbm_to_vmem [thread:$0]  %s31, 256, %s33, [#allocation3], 128, 128, 8
    $region5: #{tpu_custom_call.1} parent=1 // pred_fallthru
      _
    // Predicated region
    $region6: #{tpu_custom_call.1} parent=1 // pred_check
      _
    $region7: #{tpu_custom_call.1} parent=1 // pred_check_branch
      %40 = sbr.rel (0) target = $region9
    $region8: #{tpu_custom_call.1} parent=1 // pred_region
      %42 = vsyncadd [#allocation6], 0
      %s43 = sshll.u32 %s1, 4
      %s44 = int_to_ptr.hbm [resolvable:$true] %s43
      %s45 = sshll.u32 [#allocation5], 4
      %s46 = int_to_ptr.vmem [resolvable:$true] %s45
      %51 = dma.hbm_to_vmem [thread:$0]  %s44, 256, %s46, [#allocation6], 128, 128, 8
    $region9: #{tpu_custom_call.1} parent=1 // pred_fallthru
      _
    // Predicated region
    $region10: #{tpu_custom_call.1} parent=1 // pred_check
      _
    $region11: #{tpu_custom_call.1} parent=1 // pred_check_branch
      %53 = sbr.rel (0) target = $region13
    $region12: #{tpu_custom_call.1} parent=1 // pred_region
      %55 = vsyncadd [#allocation6], 0
      %s56 = sshll.u32 %s2, 4
      %s57 = int_to_ptr.hbm [resolvable:$true] %s56
      %s58 = sshll.u32 [#allocation7], 4
      %s59 = int_to_ptr.vmem [resolvable:$true] %s58
      %64 = dma.hbm_to_vmem [thread:$0]  %s57, 256, %s59, [#allocation6], 128, 128, 8
    $region13: #{tpu_custom_call.1} parent=1 // pred_fallthru
      _
    // Predicated region
    $region14: #{tpu_custom_call.1} parent=1 // pred_check
      _
    $region15: #{tpu_custom_call.1} parent=1 // pred_check_branch
      %66 = sbr.rel (0) target = $region17
    $region16: #{tpu_custom_call.1} parent=1 // pred_region
      _
    $region17: #{tpu_custom_call.1} parent=1 // pred_fallthru
      _
    // Predicated region
    $region18: #{tpu_custom_call.1} parent=1 // pred_check
      _
    $region19: #{tpu_custom_call.1} parent=1 // pred_check_branch
      %68 = sbr.rel (0) target = $region21
    $region20: #{tpu_custom_call.1} parent=1 // pred_region
      _
    $region21: #{tpu_custom_call.1} parent=1 // pred_fallthru
      _
    // Predicated region
    $region22: #{tpu_custom_call.1} parent=1 // pred_check
      _
    $region23: #{tpu_custom_call.1} parent=1 // pred_check_branch
      %70 = sbr.rel (0) target = $region25
    $region24: #{tpu_custom_call.1} parent=1 // pred_region
      _
    $region25: #{tpu_custom_call.1} parent=1 // pred_fallthru
      _
    // Predicated region
    $region26: #{tpu_custom_call.1} parent=1 // pred_check
      _
    $region27: #{tpu_custom_call.1} parent=1 // pred_check_branch
      %72 = sbr.rel (0) target = $region29
    $region28: #{tpu_custom_call.1} parent=1 // pred_region
      _
    $region29: #{tpu_custom_call.1} parent=1 // pred_fallthru
      _
    // Predicated region
    $region30: #{tpu_custom_call.1} parent=1 // pred_check
      _
    $region31: #{tpu_custom_call.1} parent=1 // pred_check_branch
      %74 = sbr.rel (0) target = $region33
    $region32: #{tpu_custom_call.1} parent=1 // pred_region
      _
    $region33: #{tpu_custom_call.1} parent=1 // pred_fallthru
      _
    // Predicated region
    $region34: #{tpu_custom_call.1} parent=1 // pred_check
      _
    $region35: #{tpu_custom_call.1} parent=1 // pred_check_branch
      %76 = sbr.rel (0) target = $region37
    $region36: #{tpu_custom_call.1} parent=1 // pred_region
      _
    $region37: #{tpu_custom_call.1} parent=1 // pred_fallthru
      _
    // Predicated region
    $region38: #{tpu_custom_call.1} parent=1 // pred_check
      _
    $region39: #{tpu_custom_call.1} parent=1 // pred_check_branch
      %78 = sbr.rel (0) target = $region41
    $region40: #{tpu_custom_call.1} parent=1 // pred_region
      _
    $region41: #{tpu_custom_call.1} parent=1 // pred_fallthru
      _
    // Predicated region
    $region42: #{tpu_custom_call.1} parent=1 // pred_check
      _
    $region43: #{tpu_custom_call.1} parent=1 // pred_check_branch
      %80 = sbr.rel (0) target = $region45
    $region44: #{tpu_custom_call.1} parent=1 // pred_region
      _
    $region45: #{tpu_custom_call.1} parent=1 // pred_fallthru
      _
    // Predicated region
    $region46: #{tpu_custom_call.1} parent=1 // pred_check
      _
    $region47: #{tpu_custom_call.1} parent=1 // pred_check_branch
      %82 = sbr.rel (0) target = $region49
    $region48: #{tpu_custom_call.1} parent=1 // pred_region
      %84 = vsyncadd [#allocation9], 0
      %s85 = sshll.u32 %s11, 4
      %s86 = int_to_ptr.hbm [resolvable:$true] %s85
      %s87 = sshll.u32 [#allocation8], 4
      %s88 = int_to_ptr.vmem [resolvable:$true] %s87
      %93 = dma.hbm_to_vmem [thread:$0]  %s86, 512, %s88, [#allocation9], 128, 128, 8
    $region49: #{tpu_custom_call.1} parent=1 // pred_fallthru
      _
    // Predicated region
    $region50: #{tpu_custom_call.1} parent=1 // pred_check
      _
    $region51: #{tpu_custom_call.1} parent=1 // pred_check_branch
      %95 = sbr.rel (0) target = $region53
    $region52: #{tpu_custom_call.1} parent=1 // pred_region
      _
    $region53: #{tpu_custom_call.1} parent=1 // pred_fallthru
      _
    // Predicated region
    $region54: #{tpu_custom_call.1} parent=1 // pred_check
      _
    $region55: #{tpu_custom_call.1} parent=1 // pred_check_branch
      %97 = sbr.rel (0) target = $region57
    $region56: #{tpu_custom_call.1} parent=1 // pred_region
      _
    $region57: #{tpu_custom_call.1} parent=1 // pred_fallthru
      _
    // Predicated region
    $region58: #{tpu_custom_call.1} parent=1 // pred_check
      _
    $region59: #{tpu_custom_call.1} parent=1 // pred_check_branch
      %99 = sbr.rel (0) target = $region61
    $region60: #{tpu_custom_call.1} parent=1 // pred_region
      _
    $region61: #{tpu_custom_call.1} parent=1 // pred_fallthru
      _
    // Predicated region
    $region62: #{tpu_custom_call.1} parent=1 // pred_check
      _
    $region63: #{tpu_custom_call.1} parent=1 // pred_check_branch
      %101 = sbr.rel (0) target = $region65
    $region64: #{tpu_custom_call.1} parent=1 // pred_region
      _
    $region65: #{tpu_custom_call.1} parent=1 // pred_fallthru
      _
    // Predicated region
    $region66: #{tpu_custom_call.1} parent=1 // pred_check
      _
    $region67: #{tpu_custom_call.1} parent=1 // pred_check_branch
      %103 = sbr.rel (0) target = $region69
    $region68: #{tpu_custom_call.1} parent=1 // pred_region
      _
    $region69: #{tpu_custom_call.1} parent=1 // pred_fallthru
      _
    // Predicated region
    $region70: #{tpu_custom_call.1} parent=1 // pred_check
      _
    $region71: #{tpu_custom_call.1} parent=1 // pred_check_branch
      %105 = sbr.rel (0) target = $region73
    $region72: #{tpu_custom_call.1} parent=1 // pred_region
      %107 = dma.done [#allocation3], 256
    $region73: #{tpu_custom_call.1} parent=1 // pred_fallthru
      _
    // Predicated region
    $region74: #{tpu_custom_call.1} parent=1 // pred_check
      _
    $region75: #{tpu_custom_call.1} parent=1 // pred_check_branch
      %109 = sbr.rel (0) target = $region77
    $region76: #{tpu_custom_call.1} parent=1 // pred_region
      %111 = dma.done [#allocation6], 256
    $region77: #{tpu_custom_call.1} parent=1 // pred_fallthru
      _
    // Predicated region
    $region78: #{tpu_custom_call.1} parent=1 // pred_check
      _
    $region79: #{tpu_custom_call.1} parent=1 // pred_check_branch
      %113 = sbr.rel (0) target = $region81
    $region80: #{tpu_custom_call.1} parent=1 // pred_region
      %115 = dma.done [#allocation6], 256
    $region81: #{tpu_custom_call.1} parent=1 // pred_fallthru
      _
    // Predicated region
    $region82: #{tpu_custom_call.1} parent=1 // pred_check
      _
    $region83: #{tpu_custom_call.1} parent=1 // pred_check_branch
      %117 = sbr.rel (0) target = $region85
    $region84: #{tpu_custom_call.1} parent=1 // pred_region
      %119 = dma.done [#allocation9], 512
    $region85: #{tpu_custom_call.1} parent=1 // pred_fallthru
      _
    %v120 = vld [vmem:[#allocation2] sm:$0xff]
    %v121 = vld [vmem:[#allocation2 + $0x8] sm:$0xff]
    %v122 = vld [vmem:[#allocation5] sm:$0xff]
    %v123 = vld [vmem:[#allocation5 + $0x8] sm:$0xff]
    %v124 = vadd.f32 %v120, %v122
    %v125 = vadd.f32 %v121, %v123
    %v126 = vld [vmem:[%s3] sm:$0xff]
    %v127 = vld [vmem:[%s3 + $0x8] sm:$0xff]
    %v128 = vld [vmem:[%s3 + $0x10] sm:$0xff]
    %v129 = vld [vmem:[%s3 + $0x18] sm:$0xff]
    %v130 = vld [vmem:[%s4] sm:$0x1]
    %v132 = vperm.slane %v130, 0
    %vm134 = vcmask 261120
    %v136 = vsel %vm134, %v124, 0
    %v139 = vsel %vm134, %v125, 0
    %141 = vmatpush.msra.mxu0 0.0
    %142 = vmatpush.msra.mxu0 0.0
    %143 = vmatpush.msra.mxu0 0.0
    %144 = vmatpush.msra.mxu0 0.0
    %145 = vmatpush.msra.mxu0 0.0
    %146 = vmatpush.msra.mxu0 0.0
    %147 = vmatpush.msra.mxu0 0.0
    %148 = vmatpush.msra.mxu0 0.0
    %149 = vmatpush.msra.mxu0 0.0
    %150 = vmatpush.msra.mxu0 0.0
    %151 = vmatpush.msra.mxu0 0.0
    %152 = vmatpush.msra.mxu0 0.0
    %153 = vmatpush.msra.mxu0 %v129
    %154 = vmatpush.msra.mxu0 %v128
    %155 = vmatpush.msra.mxu0 %v127
    %156 = vmatpush.msra.mxu0 %v126
    %157 = vmatmul.f32.gmra.mxu0 %v136
    %v158 = vpop.f32.mrf.mxu0
    %v159 = vadd.f32 %v132, %v158
    %160 = vmatmul.f32.gmra.mxu0 %v139
    %v161 = vpop.f32.mrf.mxu0
    %v162 = vadd.f32 %v132, %v161
    %163 = vdwg.mxu0
    %v164 = vld [vmem:[%s5] sm:$0xff]
    %v165 = vld [vmem:[%s5 + $0x8] sm:$0xff]
    %v166 = vld [vmem:[%s5 + $0x10] sm:$0xff]
    %v167 = vld [vmem:[%s5 + $0x18] sm:$0xff]
    %v168 = vld [vmem:[%s6] sm:$0x1]
    %v170 = vperm.slane %v168, 0
    %v173 = vsel %vm134, %v120, 0
    %v176 = vsel %vm134, %v121, 0
    %178 = vmatpush.msra.mxu0 0.0
    %179 = vmatpush.msra.mxu0 0.0
    %180 = vmatpush.msra.mxu0 0.0
    %181 = vmatpush.msra.mxu0 0.0
    %182 = vmatpush.msra.mxu0 0.0
    %183 = vmatpush.msra.mxu0 0.0
    %184 = vmatpush.msra.mxu0 0.0
    %185 = vmatpush.msra.mxu0 0.0
    %186 = vmatpush.msra.mxu0 0.0
    %187 = vmatpush.msra.mxu0 0.0
    %188 = vmatpush.msra.mxu0 0.0
    %189 = vmatpush.msra.mxu0 0.0
    %190 = vmatpush.msra.mxu0 %v167
    %191 = vmatpush.msra.mxu0 %v166
    %192 = vmatpush.msra.mxu0 %v165
    %193 = vmatpush.msra.mxu0 %v164
    %194 = vmatmul.f32.gmra.mxu0 %v173
    %v195 = vpop.f32.mrf.mxu0
    %v196 = vadd.f32 %v170, %v195
    %197 = vmatmul.f32.gmra.mxu0 %v176
    %v198 = vpop.f32.mrf.mxu0
    %v199 = vadd.f32 %v170, %v198
    %200 = vdwg.mxu0
    %203 = vrot.lane.b32.xlu0 %v159, 120
    %v204 = vpop.permute.xlu0 %203
    %205 = vrot.lane.b32.xlu0 %v162, 120
    %v206 = vpop.permute.xlu0 %205
    %207 = vrot.lane.b32.xlu0 %v159, 112
    %v208 = vpop.permute.xlu0 %207
    %209 = vrot.lane.b32.xlu0 %v162, 112
    %v210 = vpop.permute.xlu0 %209
    %211 = vrot.lane.b32.xlu0 %v159, 104
    %v212 = vpop.permute.xlu0 %211
    %213 = vrot.lane.b32.xlu0 %v162, 104
    %v214 = vpop.permute.xlu0 %213
    %217 = vrot.lane.b32.xlu0 %v196, 120
    %v218 = vpop.permute.xlu0 %217
    %219 = vrot.lane.b32.xlu0 %v199, 120
    %v220 = vpop.permute.xlu0 %219
    %223 = vrot.lane.b32.xlu0 %v196, 112
    %v224 = vpop.permute.xlu0 %223
    %225 = vrot.lane.b32.xlu0 %v199, 112
    %v226 = vpop.permute.xlu0 %225
    %229 = vrot.lane.b32.xlu0 %v196, 104
    %v230 = vpop.permute.xlu0 %229
    %231 = vrot.lane.b32.xlu0 %v199, 104
    %v232 = vpop.permute.xlu0 %231
    %235 = vrot.lane.b32.xlu0 %v159, 96
    %v236 = vpop.permute.xlu0 %235
    %237 = vrot.lane.b32.xlu0 %v162, 96
    %v238 = vpop.permute.xlu0 %237
    %vm239 = vcmask 64512
    %v240 = vsel %vm239, %v159, 0
    %v242 = vsel %vm239, %v162, 0
    %v244 = vsel %vm239, %v236, 0
    %v246 = vsel %vm239, %v238, 0
    %248 = vmatpush.xpose.msra.mxu0 0.0
    %249 = vmatpush.xpose.msra.mxu0 0.0
    %250 = vmatpush.xpose.msra.mxu0 0.0
    %251 = vmatpush.xpose.msra.mxu0 0.0
    %252 = vmatpush.xpose.msra.mxu0 0.0
    %253 = vmatpush.xpose.msra.mxu0 0.0
    %254 = vmatpush.xpose.msra.mxu0 0.0
    %255 = vmatpush.xpose.msra.mxu0 0.0
    %256 = vmatpush.xpose.msra.mxu0 0.0
    %257 = vmatpush.xpose.msra.mxu0 0.0
    %258 = vmatpush.xpose.msra.mxu0 0.0
    %259 = vmatpush.xpose.msra.mxu0 0.0
    %260 = vmatpush.xpose.msra.mxu0 0.0
    %261 = vmatpush.xpose.msra.mxu0 0.0
    %262 = vmatpush.xpose.msra.mxu0 %v246
    %263 = vmatpush.xpose.msra.mxu0 %v244
    %264 = vmatmul.f32.gmra.mxu0 %v240
    %v265 = vpop.f32.mrf.mxu0
    %v266 = vadd.f32 0.0, %v265
    %267 = vmatmul.f32.gmra.mxu0 %v242
    %v268 = vpop.f32.mrf.mxu0
    %v269 = vadd.f32 0.0, %v268
    %270 = vdwg.mxu0
    %271 = vrot.lane.b32.xlu0 %v204, 96
    %v272 = vpop.permute.xlu0 %271
    %273 = vrot.lane.b32.xlu0 %v206, 96
    %v274 = vpop.permute.xlu0 %273
    %v275 = vsel %vm239, %v204, 0
    %v277 = vsel %vm239, %v206, 0
    %v279 = vsel %vm239, %v272, 0
    %v281 = vsel %vm239, %v274, 0
    %283 = vmatpush.xpose.msra.mxu0 0.0
    %284 = vmatpush.xpose.msra.mxu0 0.0
    %285 = vmatpush.xpose.msra.mxu0 0.0
    %286 = vmatpush.xpose.msra.mxu0 0.0
    %287 = vmatpush.xpose.msra.mxu0 0.0
    %288 = vmatpush.xpose.msra.mxu0 0.0
    %289 = vmatpush.xpose.msra.mxu0 0.0
    %290 = vmatpush.xpose.msra.mxu0 0.0
    %291 = vmatpush.xpose.msra.mxu0 0.0
    %292 = vmatpush.xpose.msra.mxu0 0.0
    %293 = vmatpush.xpose.msra.mxu0 0.0
    %294 = vmatpush.xpose.msra.mxu0 0.0
    %295 = vmatpush.xpose.msra.mxu0 0.0
    %296 = vmatpush.xpose.msra.mxu0 0.0
    %297 = vmatpush.xpose.msra.mxu0 %v281
    %298 = vmatpush.xpose.msra.mxu0 %v279
    %299 = vmatmul.f32.gmra.mxu0 %v275
    %v300 = vpop.f32.mrf.mxu0
    %v301 = vadd.f32 0.0, %v300
    %302 = vmatmul.f32.gmra.mxu0 %v277
    %v303 = vpop.f32.mrf.mxu0
    %v304 = vadd.f32 0.0, %v303
    %305 = vdwg.mxu0
    %306 = vrot.lane.b32.xlu0 %v208, 96
    %v307 = vpop.permute.xlu0 %306
    %308 = vrot.lane.b32.xlu0 %v210, 96
    %v309 = vpop.permute.xlu0 %308
    %v310 = vsel %vm239, %v208, 0
    %v312 = vsel %vm239, %v210, 0
    %v314 = vsel %vm239, %v307, 0
    %v316 = vsel %vm239, %v309, 0
    %318 = vmatpush.xpose.msra.mxu0 0.0
    %319 = vmatpush.xpose.msra.mxu0 0.0
    %320 = vmatpush.xpose.msra.mxu0 0.0
    %321 = vmatpush.xpose.msra.mxu0 0.0
    %322 = vmatpush.xpose.msra.mxu0 0.0
    %323 = vmatpush.xpose.msra.mxu0 0.0
    %324 = vmatpush.xpose.msra.mxu0 0.0
    %325 = vmatpush.xpose.msra.mxu0 0.0
    %326 = vmatpush.xpose.msra.mxu0 0.0
    %327 = vmatpush.xpose.msra.mxu0 0.0
    %328 = vmatpush.xpose.msra.mxu0 0.0
    %329 = vmatpush.xpose.msra.mxu0 0.0
    %330 = vmatpush.xpose.msra.mxu0 0.0
    %331 = vmatpush.xpose.msra.mxu0 0.0
    %332 = vmatpush.xpose.msra.mxu0 %v316
    %333 = vmatpush.xpose.msra.mxu0 %v314
    %334 = vmatmul.f32.gmra.mxu0 %v310
    %v335 = vpop.f32.mrf.mxu0
    %v336 = vadd.f32 0.0, %v335
    %337 = vmatmul.f32.gmra.mxu0 %v312
    %v338 = vpop.f32.mrf.mxu0
    %v339 = vadd.f32 0.0, %v338
    %340 = vdwg.mxu0
    %341 = vrot.lane.b32.xlu0 %v212, 96
    %v342 = vpop.permute.xlu0 %341
    %343 = vrot.lane.b32.xlu0 %v214, 96
    %v344 = vpop.permute.xlu0 %343
    %v345 = vsel %vm239, %v212, 0
    %v347 = vsel %vm239, %v214, 0
    %v349 = vsel %vm239, %v342, 0
    %v351 = vsel %vm239, %v344, 0
    %353 = vmatpush.xpose.msra.mxu0 0.0
    %354 = vmatpush.xpose.msra.mxu0 0.0
    %355 = vmatpush.xpose.msra.mxu0 0.0
    %356 = vmatpush.xpose.msra.mxu0 0.0
    %357 = vmatpush.xpose.msra.mxu0 0.0
    %358 = vmatpush.xpose.msra.mxu0 0.0
    %359 = vmatpush.xpose.msra.mxu0 0.0
    %360 = vmatpush.xpose.msra.mxu0 0.0
    %361 = vmatpush.xpose.msra.mxu0 0.0
    %362 = vmatpush.xpose.msra.mxu0 0.0
    %363 = vmatpush.xpose.msra.mxu0 0.0
    %364 = vmatpush.xpose.msra.mxu0 0.0
    %365 = vmatpush.xpose.msra.mxu0 0.0
    %366 = vmatpush.xpose.msra.mxu0 0.0
    %367 = vmatpush.xpose.msra.mxu0 %v351
    %368 = vmatpush.xpose.msra.mxu0 %v349
    %369 = vmatmul.f32.gmra.mxu0 %v345
    %v370 = vpop.f32.mrf.mxu0
    %v371 = vadd.f32 0.0, %v370
    %372 = vmatmul.f32.gmra.mxu0 %v347
    %v373 = vpop.f32.mrf.mxu0
    %v374 = vadd.f32 0.0, %v373
    %375 = vdwg.mxu0
    %v376 = vmul.f32 %v266, 0.35355338
    %v377 = vmul.f32 %v269, 0.35355338
    %v378 = vmul.f32 %v301, 0.35355338
    %v379 = vmul.f32 %v304, 0.35355338
    %v380 = vmul.f32 %v336, 0.35355338
    %v381 = vmul.f32 %v339, 0.35355338
    %v382 = vmul.f32 %v371, 0.35355338
    %v383 = vmul.f32 %v374, 0.35355338
    %v384 = vld [vmem:[#allocation7] sm:$0xff]
    %v385 = vld [vmem:[#allocation7 + $0x8] sm:$0xff]
    %v386 = vadd.f32 %v376, %v384
    %v387 = vadd.f32 %v377, %v385
    %v388 = vadd.f32 %v378, %v384
    %v389 = vadd.f32 %v379, %v385
    %v390 = vadd.f32 %v380, %v384
    %v391 = vadd.f32 %v381, %v385
    %v392 = vadd.f32 %v382, %v384
    %v393 = vadd.f32 %v383, %v385
    %vm394 = vcmask 130048
    %v395 = vsel %vm394, %v386, -inf
    %396 = vmax.xlane.f32.xlu0 %v395
    %v397 = vpop.xlane.xlu0 %396
    %v398 = vsel %vm394, %v387, -inf
    %399 = vmax.xlane.f32.xlu0 %v398
    %v400 = vpop.xlane.xlu0 %399
    %v401 = vsel %vm394, %v388, -inf
    %402 = vmax.xlane.f32.xlu0 %v401
    %v403 = vpop.xlane.xlu0 %402
    %v404 = vsel %vm394, %v389, -inf
    %405 = vmax.xlane.f32.xlu0 %v404
    %v406 = vpop.xlane.xlu0 %405
    %v407 = vsel %vm394, %v390, -inf
    %408 = vmax.xlane.f32.xlu0 %v407
    %v409 = vpop.xlane.xlu0 %408
    %v410 = vsel %vm394, %v391, -inf
    %411 = vmax.xlane.f32.xlu0 %v410
    %v412 = vpop.xlane.xlu0 %411
    %v413 = vsel %vm394, %v392, -inf
    %414 = vmax.xlane.f32.xlu0 %v413
    %v415 = vpop.xlane.xlu0 %414
    %v416 = vsel %vm394, %v393, -inf
    %417 = vmax.xlane.f32.xlu0 %v416
    %v418 = vpop.xlane.xlu0 %417
    %v419 = vsub.f32 %v386, %v397
    %v420 = vsub.f32 %v387, %v400
    %v421 = vsub.f32 %v388, %v403
    %v422 = vsub.f32 %v389, %v406
    %v423 = vsub.f32 %v390, %v409
    %v424 = vsub.f32 %v391, %v412
    %v425 = vsub.f32 %v392, %v415
    %v426 = vsub.f32 %v393, %v418
    %v427 = vmul.f32 %v419, 1.442695
    %v428 = vpow.pop %v427
    %v429 = vmul.f32 %v420, 1.442695
    %v430 = vpow.pop %v429
    %v431 = vmul.f32 %v421, 1.442695
    %v432 = vpow.pop %v431
    %v433 = vmul.f32 %v422, 1.442695
    %v434 = vpow.pop %v433
    %v435 = vmul.f32 %v423, 1.442695
    %v436 = vpow.pop %v435
    %v437 = vmul.f32 %v424, 1.442695
    %v438 = vpow.pop %v437
    %v439 = vmul.f32 %v425, 1.442695
    %v440 = vpow.pop %v439
    %v441 = vmul.f32 %v426, 1.442695
    %v442 = vpow.pop %v441
    %v443 = vsel %vm394, %v428, 0.0
    %444 = vadd.xlane.f32.xlu0 %v443
    %v445 = vpop.xlane.xlu0 %444
    %v446 = vsel %vm394, %v430, 0.0
    %447 = vadd.xlane.f32.xlu0 %v446
    %v448 = vpop.xlane.xlu0 %447
    %v449 = vsel %vm394, %v432, 0.0
    %450 = vadd.xlane.f32.xlu0 %v449
    %v451 = vpop.xlane.xlu0 %450
    %v452 = vsel %vm394, %v434, 0.0
    %453 = vadd.xlane.f32.xlu0 %v452
    %v454 = vpop.xlane.xlu0 %453
    %v455 = vsel %vm394, %v436, 0.0
    %456 = vadd.xlane.f32.xlu0 %v455
    %v457 = vpop.xlane.xlu0 %456
    %v458 = vsel %vm394, %v438, 0.0
    %459 = vadd.xlane.f32.xlu0 %v458
    %v460 = vpop.xlane.xlu0 %459
    %v461 = vsel %vm394, %v440, 0.0
    %462 = vadd.xlane.f32.xlu0 %v461
    %v463 = vpop.xlane.xlu0 %462
    %v464 = vsel %vm394, %v442, 0.0
    %465 = vadd.xlane.f32.xlu0 %v464
    %v466 = vpop.xlane.xlu0 %465
    %v467 = vrcp.pop %v445
    %v468 = vmul.f32 %v445, %v467
    %v469 = vsub.f32 1.0, %v468
    %v470 = vmul.f32 %v467, %v469
    %v471 = vadd.f32 %v467, %v470
    %vm472 = vweird.f32 %v445
    %vm473 = vweird.f32 %v467
    %vm474 = vmor %vm472, %vm473
    %v475 = vsel %vm474, %v467, %v471
    %v476 = vand.u32 2147483647, %v445
    %vm477 = vcmp.eq.f32.partialorder %v476, 8.507059e+37
    %v478 = vand.u32 %v445, 2147483648
    %v479 = vor.u32 1.1754944e-38, %v478
    %v480 = vsel %vm477, %v479, %v475
    %v481 = vrcp.pop %v448
    %v482 = vmul.f32 %v448, %v481
    %v483 = vsub.f32 1.0, %v482
    %v484 = vmul.f32 %v481, %v483
    %v485 = vadd.f32 %v481, %v484
    %vm486 = vweird.f32 %v448
    %vm487 = vweird.f32 %v481
    %vm488 = vmor %vm486, %vm487
    %v489 = vsel %vm488, %v481, %v485
    %v490 = vand.u32 2147483647, %v448
    %vm491 = vcmp.eq.f32.partialorder %v490, 8.507059e+37
    %v492 = vand.u32 %v448, 2147483648
    %v493 = vor.u32 1.1754944e-38, %v492
    %v494 = vsel %vm491, %v493, %v489
    %v495 = vrcp.pop %v451
    %v496 = vmul.f32 %v451, %v495
    %v497 = vsub.f32 1.0, %v496
    %v498 = vmul.f32 %v495, %v497
    %v499 = vadd.f32 %v495, %v498
    %vm500 = vweird.f32 %v451
    %vm501 = vweird.f32 %v495
    %vm502 = vmor %vm500, %vm501
    %v503 = vsel %vm502, %v495, %v499
    %v504 = vand.u32 2147483647, %v451
    %vm505 = vcmp.eq.f32.partialorder %v504, 8.507059e+37
    %v506 = vand.u32 %v451, 2147483648
    %v507 = vor.u32 1.1754944e-38, %v506
    %v508 = vsel %vm505, %v507, %v503
    %v509 = vrcp.pop %v454
    %v510 = vmul.f32 %v454, %v509
    %v511 = vsub.f32 1.0, %v510
    %v512 = vmul.f32 %v509, %v511
    %v513 = vadd.f32 %v509, %v512
    %vm514 = vweird.f32 %v454
    %vm515 = vweird.f32 %v509
    %vm516 = vmor %vm514, %vm515
    %v517 = vsel %vm516, %v509, %v513
    %v518 = vand.u32 2147483647, %v454
    %vm519 = vcmp.eq.f32.partialorder %v518, 8.507059e+37
    %v520 = vand.u32 %v454, 2147483648
    %v521 = vor.u32 1.1754944e-38, %v520
    %v522 = vsel %vm519, %v521, %v517
    %v523 = vrcp.pop %v457
    %v524 = vmul.f32 %v457, %v523
    %v525 = vsub.f32 1.0, %v524
    %v526 = vmul.f32 %v523, %v525
    %v527 = vadd.f32 %v523, %v526
    %vm528 = vweird.f32 %v457
    %vm529 = vweird.f32 %v523
    %vm530 = vmor %vm528, %vm529
    %v531 = vsel %vm530, %v523, %v527
    %v532 = vand.u32 2147483647, %v457
    %vm533 = vcmp.eq.f32.partialorder %v532, 8.507059e+37
    %v534 = vand.u32 %v457, 2147483648
    %v535 = vor.u32 1.1754944e-38, %v534
    %v536 = vsel %vm533, %v535, %v531
    %v537 = vrcp.pop %v460
    %v538 = vmul.f32 %v460, %v537
    %v539 = vsub.f32 1.0, %v538
    %v540 = vmul.f32 %v537, %v539
    %v541 = vadd.f32 %v537, %v540
    %vm542 = vweird.f32 %v460
    %vm543 = vweird.f32 %v537
    %vm544 = vmor %vm542, %vm543
    %v545 = vsel %vm544, %v537, %v541
    %v546 = vand.u32 2147483647, %v460
    %vm547 = vcmp.eq.f32.partialorder %v546, 8.507059e+37
    %v548 = vand.u32 %v460, 2147483648
    %v549 = vor.u32 1.1754944e-38, %v548
    %v550 = vsel %vm547, %v549, %v545
    %v551 = vrcp.pop %v463
    %v552 = vmul.f32 %v463, %v551
    %v553 = vsub.f32 1.0, %v552
    %v554 = vmul.f32 %v551, %v553
    %v555 = vadd.f32 %v551, %v554
    %vm556 = vweird.f32 %v463
    %vm557 = vweird.f32 %v551
    %vm558 = vmor %vm556, %vm557
    %v559 = vsel %vm558, %v551, %v555
    %v560 = vand.u32 2147483647, %v463
    %vm561 = vcmp.eq.f32.partialorder %v560, 8.507059e+37
    %v562 = vand.u32 %v463, 2147483648
    %v563 = vor.u32 1.1754944e-38, %v562
    %v564 = vsel %vm561, %v563, %v559
    %v565 = vrcp.pop %v466
    %v566 = vmul.f32 %v466, %v565
    %v567 = vsub.f32 1.0, %v566
    %v568 = vmul.f32 %v565, %v567
    %v569 = vadd.f32 %v565, %v568
    %vm570 = vweird.f32 %v466
    %vm571 = vweird.f32 %v565
    %vm572 = vmor %vm570, %vm571
    %v573 = vsel %vm572, %v565, %v569
    %v574 = vand.u32 2147483647, %v466
    %vm575 = vcmp.eq.f32.partialorder %v574, 8.507059e+37
    %v576 = vand.u32 %v466, 2147483648
    %v577 = vor.u32 1.1754944e-38, %v576
    %v578 = vsel %vm575, %v577, %v573
    %v579 = vmul.f32 %v428, %v480
    %v580 = vmul.f32 %v430, %v494
    %v581 = vmul.f32 %v432, %v508
    %v582 = vmul.f32 %v434, %v522
    %v583 = vmul.f32 %v436, %v536
    %v584 = vmul.f32 %v438, %v550
    %v585 = vmul.f32 %v440, %v564
    %v586 = vmul.f32 %v442, %v578
    %v588 = vsel %vm394, %v579, 0
    %v591 = vsel %vm394, %v580, 0
    %593 = vmatpush.msra.mxu0 0.0
    %594 = vmatpush.msra.mxu0 0.0
    %595 = vmatpush.msra.mxu0 0.0
    %596 = vmatpush.msra.mxu0 0.0
    %597 = vmatpush.msra.mxu0 0.0
    %598 = vmatpush.msra.mxu0 0.0
    %599 = vmatpush.msra.mxu0 0.0
    %600 = vmatpush.msra.mxu0 0.0
    %601 = vmatpush.msra.mxu0 0.0
    %602 = vmatpush.msra.mxu0 0.0
    %603 = vmatpush.msra.mxu0 0.0
    %604 = vmatpush.msra.mxu0 0.0
    %605 = vmatpush.msra.mxu0 0.0
    %606 = vmatpush.msra.mxu0 0.0
    %607 = vmatpush.msra.mxu0 %v199
    %608 = vmatpush.msra.mxu0 %v196
    %609 = vmatmul.f32.gmra.mxu0 %v588
    %v610 = vpop.f32.mrf.mxu0
    %v611 = vadd.f32 0.0, %v610
    %612 = vmatmul.f32.gmra.mxu0 %v591
    %v613 = vpop.f32.mrf.mxu0
    %v614 = vadd.f32 0.0, %v613
    %615 = vdwg.mxu0
    %v617 = vsel %vm394, %v581, 0
    %v620 = vsel %vm394, %v582, 0
    %622 = vmatpush.msra.mxu0 0.0
    %623 = vmatpush.msra.mxu0 0.0
    %624 = vmatpush.msra.mxu0 0.0
    %625 = vmatpush.msra.mxu0 0.0
    %626 = vmatpush.msra.mxu0 0.0
    %627 = vmatpush.msra.mxu0 0.0
    %628 = vmatpush.msra.mxu0 0.0
    %629 = vmatpush.msra.mxu0 0.0
    %630 = vmatpush.msra.mxu0 0.0
    %631 = vmatpush.msra.mxu0 0.0
    %632 = vmatpush.msra.mxu0 0.0
    %633 = vmatpush.msra.mxu0 0.0
    %634 = vmatpush.msra.mxu0 0.0
    %635 = vmatpush.msra.mxu0 0.0
    %636 = vmatpush.msra.mxu0 %v220
    %637 = vmatpush.msra.mxu0 %v218
    %638 = vmatmul.f32.gmra.mxu0 %v617
    %v639 = vpop.f32.mrf.mxu0
    %v640 = vadd.f32 0.0, %v639
    %641 = vmatmul.f32.gmra.mxu0 %v620
    %v642 = vpop.f32.mrf.mxu0
    %v643 = vadd.f32 0.0, %v642
    %644 = vdwg.mxu0
    %v646 = vsel %vm394, %v583, 0
    %v649 = vsel %vm394, %v584, 0
    %651 = vmatpush.msra.mxu0 0.0
    %652 = vmatpush.msra.mxu0 0.0
    %653 = vmatpush.msra.mxu0 0.0
    %654 = vmatpush.msra.mxu0 0.0
    %655 = vmatpush.msra.mxu0 0.0
    %656 = vmatpush.msra.mxu0 0.0
    %657 = vmatpush.msra.mxu0 0.0
    %658 = vmatpush.msra.mxu0 0.0
    %659 = vmatpush.msra.mxu0 0.0
    %660 = vmatpush.msra.mxu0 0.0
    %661 = vmatpush.msra.mxu0 0.0
    %662 = vmatpush.msra.mxu0 0.0
    %663 = vmatpush.msra.mxu0 0.0
    %664 = vmatpush.msra.mxu0 0.0
    %665 = vmatpush.msra.mxu0 %v226
    %666 = vmatpush.msra.mxu0 %v224
    %667 = vmatmul.f32.gmra.mxu0 %v646
    %v668 = vpop.f32.mrf.mxu0
    %v669 = vadd.f32 0.0, %v668
    %670 = vmatmul.f32.gmra.mxu0 %v649
    %v671 = vpop.f32.mrf.mxu0
    %v672 = vadd.f32 0.0, %v671
    %673 = vdwg.mxu0
    %v675 = vsel %vm394, %v585, 0
    %v678 = vsel %vm394, %v586, 0
    %680 = vmatpush.msra.mxu0 0.0
    %681 = vmatpush.msra.mxu0 0.0
    %682 = vmatpush.msra.mxu0 0.0
    %683 = vmatpush.msra.mxu0 0.0
    %684 = vmatpush.msra.mxu0 0.0
    %685 = vmatpush.msra.mxu0 0.0
    %686 = vmatpush.msra.mxu0 0.0
    %687 = vmatpush.msra.mxu0 0.0
    %688 = vmatpush.msra.mxu0 0.0
    %689 = vmatpush.msra.mxu0 0.0
    %690 = vmatpush.msra.mxu0 0.0
    %691 = vmatpush.msra.mxu0 0.0
    %692 = vmatpush.msra.mxu0 0.0
    %693 = vmatpush.msra.mxu0 0.0
    %694 = vmatpush.msra.mxu0 %v232
    %695 = vmatpush.msra.mxu0 %v230
    %696 = vmatmul.f32.gmra.mxu0 %v675
    %v697 = vpop.f32.mrf.mxu0
    %v698 = vadd.f32 0.0, %v697
    %699 = vmatmul.f32.gmra.mxu0 %v678
    %v700 = vpop.f32.mrf.mxu0
    %v701 = vadd.f32 0.0, %v700
    %702 = vdwg.mxu0
    %v703 = vld [vmem:[%s8] sm:$0x1]
    %v704 = vld [vmem:[%s7] sm:$0xff]
    %v706 = vsel %vm239, %v611, 0
    %v709 = vsel %vm239, %v614, 0
    %711 = vmatpush.msra.mxu0 0.0
    %712 = vmatpush.msra.mxu0 0.0
    %713 = vmatpush.msra.mxu0 0.0
    %714 = vmatpush.msra.mxu0 0.0
    %715 = vmatpush.msra.mxu0 0.0
    %716 = vmatpush.msra.mxu0 0.0
    %717 = vmatpush.msra.mxu0 0.0
    %718 = vmatpush.msra.mxu0 0.0
    %719 = vmatpush.msra.mxu0 0.0
    %720 = vmatpush.msra.mxu0 0.0
    %721 = vmatpush.msra.mxu0 0.0
    %722 = vmatpush.msra.mxu0 0.0
    %723 = vmatpush.msra.mxu0 0.0
    %724 = vmatpush.msra.mxu0 0.0
    %725 = vmatpush.msra.mxu0 0.0
    %726 = vmatpush.msra.mxu0 %v704
    %727 = vmatmul.f32.gmra.mxu0 %v706
    %v728 = vpop.f32.mrf.mxu0
    %v729 = vadd.f32 0.0, %v728
    %730 = vmatmul.f32.gmra.mxu0 %v709
    %v731 = vpop.f32.mrf.mxu0
    %v732 = vadd.f32 0.0, %v731
    %733 = vdwg.mxu0
    %v735 = vperm.slane %v703, 0
    %v737 = vadd.f32 %v735, %v729
    %v738 = vadd.f32 %v735, %v732
    %s739 = scalar_lea.vmem %s7, 8
    %v740 = vld [vmem:[%s739] sm:$0xff]
    %v742 = vsel %vm239, %v640, 0
    %v745 = vsel %vm239, %v643, 0
    %747 = vmatpush.msra.mxu0 0.0
    %748 = vmatpush.msra.mxu0 0.0
    %749 = vmatpush.msra.mxu0 0.0
    %750 = vmatpush.msra.mxu0 0.0
    %751 = vmatpush.msra.mxu0 0.0
    %752 = vmatpush.msra.mxu0 0.0
    %753 = vmatpush.msra.mxu0 0.0
    %754 = vmatpush.msra.mxu0 0.0
    %755 = vmatpush.msra.mxu0 0.0
    %756 = vmatpush.msra.mxu0 0.0
    %757 = vmatpush.msra.mxu0 0.0
    %758 = vmatpush.msra.mxu0 0.0
    %759 = vmatpush.msra.mxu0 0.0
    %760 = vmatpush.msra.mxu0 0.0
    %761 = vmatpush.msra.mxu0 0.0
    %762 = vmatpush.msra.mxu0 %v740
    %763 = vmatmul.f32.gmra.mxu0 %v742
    %v764 = vpop.f32.mrf.mxu0
    %v765 = vadd.f32 0.0, %v764
    %766 = vmatmul.f32.gmra.mxu0 %v745
    %v767 = vpop.f32.mrf.mxu0
    %v768 = vadd.f32 0.0, %v767
    %769 = vdwg.mxu0
    %v770 = vadd.f32 %v737, %v765
    %v771 = vadd.f32 %v738, %v768
    %s772 = scalar_lea.vmem %s7, 16
    %v773 = vld [vmem:[%s772] sm:$0xff]
    %v775 = vsel %vm239, %v669, 0
    %v778 = vsel %vm239, %v672, 0
    %780 = vmatpush.msra.mxu0 0.0
    %781 = vmatpush.msra.mxu0 0.0
    %782 = vmatpush.msra.mxu0 0.0
    %783 = vmatpush.msra.mxu0 0.0
    %784 = vmatpush.msra.mxu0 0.0
    %785 = vmatpush.msra.mxu0 0.0
    %786 = vmatpush.msra.mxu0 0.0
    %787 = vmatpush.msra.mxu0 0.0
    %788 = vmatpush.msra.mxu0 0.0
    %789 = vmatpush.msra.mxu0 0.0
    %790 = vmatpush.msra.mxu0 0.0
    %791 = vmatpush.msra.mxu0 0.0
    %792 = vmatpush.msra.mxu0 0.0
    %793 = vmatpush.msra.mxu0 0.0
    %794 = vmatpush.msra.mxu0 0.0
    %795 = vmatpush.msra.mxu0 %v773
    %796 = vmatmul.f32.gmra.mxu0 %v775
    %v797 = vpop.f32.mrf.mxu0
    %v798 = vadd.f32 0.0, %v797
    %799 = vmatmul.f32.gmra.mxu0 %v778
    %v800 = vpop.f32.mrf.mxu0
    %v801 = vadd.f32 0.0, %v800
    %802 = vdwg.mxu0
    %v803 = vadd.f32 %v770, %v798
    %v804 = vadd.f32 %v771, %v801
    %s805 = scalar_lea.vmem %s7, 24
    %v806 = vld [vmem:[%s805] sm:$0xff]
    %v808 = vsel %vm239, %v698, 0
    %v811 = vsel %vm239, %v701, 0
    %813 = vmatpush.msra.mxu0 0.0
    %814 = vmatpush.msra.mxu0 0.0
    %815 = vmatpush.msra.mxu0 0.0
    %816 = vmatpush.msra.mxu0 0.0
    %817 = vmatpush.msra.mxu0 0.0
    %818 = vmatpush.msra.mxu0 0.0
    %819 = vmatpush.msra.mxu0 0.0
    %820 = vmatpush.msra.mxu0 0.0
    %821 = vmatpush.msra.mxu0 0.0
    %822 = vmatpush.msra.mxu0 0.0
    %823 = vmatpush.msra.mxu0 0.0
    %824 = vmatpush.msra.mxu0 0.0
    %825 = vmatpush.msra.mxu0 0.0
    %826 = vmatpush.msra.mxu0 0.0
    %827 = vmatpush.msra.mxu0 0.0
    %828 = vmatpush.msra.mxu0 %v806
    %829 = vmatmul.f32.gmra.mxu0 %v808
    %v830 = vpop.f32.mrf.mxu0
    %v831 = vadd.f32 0.0, %v830
    %832 = vmatmul.f32.gmra.mxu0 %v811
    %v833 = vpop.f32.mrf.mxu0
    %v834 = vadd.f32 0.0, %v833
    %835 = vdwg.mxu0
    %v836 = vadd.f32 %v803, %v831
    %v837 = vadd.f32 %v804, %v834
    %v838 = vadd.f32 %v120, %v836
    %v839 = vadd.f32 %v121, %v837
    %v840 = vsel %vm134, %v838, 0.0
    %841 = vadd.xlane.f32.xlu0 %v840
    %v842 = vpop.xlane.xlu0 %841
    %v843 = vsel %vm134, %v839, 0.0
    %844 = vadd.xlane.f32.xlu0 %v843
    %v845 = vpop.xlane.xlu0 %844
    %v846 = vrcp.pop 32.0
    %v847 = vmul.f32 32.0, %v846
    %v848 = vsub.f32 1.0, %v847
    %v849 = vmul.f32 %v846, %v848
    %v850 = vadd.f32 %v846, %v849
    %vm851 = vweird.f32 %v846
    %v852 = vsel %vm851, %v846, %v850
    %v853 = vmul.f32 %v842, %v852
    %v854 = vmul.f32 %v845, %v852
    %v855 = vsub.f32 %v838, %v853
    %v856 = vsub.f32 %v839, %v854
    %v857 = vmul.f32 %v855, %v855
    %v858 = vmul.f32 %v856, %v856
    %v859 = vsel %vm134, %v857, 0.0
    %860 = vadd.xlane.f32.xlu0 %v859
    %v861 = vpop.xlane.xlu0 %860
    %v862 = vsel %vm134, %v858, 0.0
    %863 = vadd.xlane.f32.xlu0 %v862
    %v864 = vpop.xlane.xlu0 %863
    %v865 = vmul.f32 %v861, %v852
    %v866 = vmul.f32 %v864, %v852
    %v867 = vadd.f32 %v865, 1e-05
    %v868 = vadd.f32 %v866, 1e-05
    %v869 = vrsqrt.pop %v867
    %v870 = vmul.f32 %v869, %v867
    %v871 = vmul.f32 %v870, %v869
    %v872 = vmul.f32 0.5, %v871
    %v873 = vsub.f32 1.5, %v872
    %v874 = vmul.f32 %v869, %v873
    %vm875 = vweird.f32 %v867
    %vm876 = vweird.f32 %v869
    %vm877 = vmor %vm875, %vm876
    %v878 = vsel %vm877, %v869, %v874
    %v879 = vrsqrt.pop %v868
    %v880 = vmul.f32 %v879, %v868
    %v881 = vmul.f32 %v880, %v879
    %v882 = vmul.f32 0.5, %v881
    %v883 = vsub.f32 1.5, %v882
    %v884 = vmul.f32 %v879, %v883
    %vm885 = vweird.f32 %v868
    %vm886 = vweird.f32 %v879
    %vm887 = vmor %vm885, %vm886
    %v888 = vsel %vm887, %v879, %v884
    %v889 = vmul.f32 %v855, %v878
    %v890 = vmul.f32 %v856, %v888
    %v891 = vld [vmem:[%s9] sm:$0x1]
    %v893 = vperm.slane %v891, 0
    %v895 = vmul.f32 %v889, %v893
    %v896 = vmul.f32 %v890, %v893
    %v897 = vld [vmem:[%s10] sm:$0x1]
    %v899 = vperm.slane %v897, 0
    %v901 = vadd.f32 %v895, %v899
    %v902 = vadd.f32 %v896, %v899
    %v903 = vld [vmem:[#allocation8] sm:$0xff]
    %v904 = vld [vmem:[#allocation8 + $0x8] sm:$0xff]
    %v905 = vld [vmem:[#allocation8 + $0x10] sm:$0xff]
    %v906 = vld [vmem:[#allocation8 + $0x18] sm:$0xff]
    %v907 = vld [vmem:[%s12] sm:$0x1]
    %v909 = vperm.slane %v907, 0
    %v912 = vsel %vm134, %v901, 0
    %v915 = vsel %vm134, %v902, 0
    %917 = vmatpush.msra.mxu0 0.0
    %918 = vmatpush.msra.mxu0 0.0
    %919 = vmatpush.msra.mxu0 0.0
    %920 = vmatpush.msra.mxu0 0.0
    %921 = vmatpush.msra.mxu0 0.0
    %922 = vmatpush.msra.mxu0 0.0
    %923 = vmatpush.msra.mxu0 0.0
    %924 = vmatpush.msra.mxu0 0.0
    %925 = vmatpush.msra.mxu0 0.0
    %926 = vmatpush.msra.mxu0 0.0
    %927 = vmatpush.msra.mxu0 0.0
    %928 = vmatpush.msra.mxu0 0.0
    %929 = vmatpush.msra.mxu0 %v906
    %930 = vmatpush.msra.mxu0 %v905
    %931 = vmatpush.msra.mxu0 %v904
    %932 = vmatpush.msra.mxu0 %v903
    %933 = vmatmul.f32.gmra.mxu0 %v912
    %v934 = vpop.f32.mrf.mxu0
    %v935 = vadd.f32 %v909, %v934
    %936 = vmatmul.f32.gmra.mxu0 %v915
    %v937 = vpop.f32.mrf.mxu0
    %v938 = vadd.f32 %v909, %v937
    %939 = vdwg.mxu0
    %v940 = vmax.f32 %v935, 0.0
    %v941 = vmax.f32 %v938, 0.0
    %v942 = vld [vmem:[%s13] sm:$0xff]
    %v943 = vld [vmem:[%s13 + $0x8] sm:$0xff]
    %v944 = vld [vmem:[%s13 + $0x10] sm:$0xff]
    %v945 = vld [vmem:[%s13 + $0x18] sm:$0xff]
    %v946 = vld [vmem:[%s13 + $0x20] sm:$0xff]
    %v947 = vld [vmem:[%s13 + $0x28] sm:$0xff]
    %v948 = vld [vmem:[%s13 + $0x30] sm:$0xff]
    %v949 = vld [vmem:[%s13 + $0x38] sm:$0xff]
    %v950 = vld [vmem:[%s14] sm:$0x1]
    %v952 = vperm.slane %v950, 0
    %vm954 = vcmask 523264
    %v956 = vsel %vm954, %v940, 0
    %v959 = vsel %vm954, %v941, 0
    %961 = vmatpush.msra.mxu0 0.0
    %962 = vmatpush.msra.mxu0 0.0
    %963 = vmatpush.msra.mxu0 0.0
    %964 = vmatpush.msra.mxu0 0.0
    %965 = vmatpush.msra.mxu0 0.0
    %966 = vmatpush.msra.mxu0 0.0
    %967 = vmatpush.msra.mxu0 0.0
    %968 = vmatpush.msra.mxu0 0.0
    %969 = vmatpush.msra.mxu0 %v949
    %970 = vmatpush.msra.mxu0 %v948
    %971 = vmatpush.msra.mxu0 %v947
    %972 = vmatpush.msra.mxu0 %v946
    %973 = vmatpush.msra.mxu0 %v945
    %974 = vmatpush.msra.mxu0 %v944
    %975 = vmatpush.msra.mxu0 %v943
    %976 = vmatpush.msra.mxu0 %v942
    %977 = vmatmul.f32.gmra.mxu0 %v956
    %v978 = vpop.f32.mrf.mxu0
    %v979 = vadd.f32 %v952, %v978
    %980 = vmatmul.f32.gmra.mxu0 %v959
    %v981 = vpop.f32.mrf.mxu0
    %v982 = vadd.f32 %v952, %v981
    %983 = vdwg.mxu0
    %v984 = vadd.f32 %v901, %v979
    %v985 = vadd.f32 %v902, %v982
    %v986 = vsel %vm134, %v984, 0.0
    %987 = vadd.xlane.f32.xlu0 %v986
    %v988 = vpop.xlane.xlu0 %987
    %v989 = vsel %vm134, %v985, 0.0
    %990 = vadd.xlane.f32.xlu0 %v989
    %v991 = vpop.xlane.xlu0 %990
    %v992 = vmul.f32 %v988, %v852
    %v993 = vmul.f32 %v991, %v852
    %v994 = vsub.f32 %v984, %v992
    %v995 = vsub.f32 %v985, %v993
    %v996 = vmul.f32 %v994, %v994
    %v997 = vmul.f32 %v995, %v995
    %v998 = vsel %vm134, %v996, 0.0
    %999 = vadd.xlane.f32.xlu0 %v998
    %v1000 = vpop.xlane.xlu0 %999
    %v1001 = vsel %vm134, %v997, 0.0
    %1002 = vadd.xlane.f32.xlu0 %v1001
    %v1003 = vpop.xlane.xlu0 %1002
    %v1004 = vmul.f32 %v1000, %v852
    %v1005 = vmul.f32 %v1003, %v852
    %v1006 = vadd.f32 %v1004, 1e-05
    %v1007 = vadd.f32 %v1005, 1e-05
    %v1008 = vrsqrt.pop %v1006
    %v1009 = vmul.f32 %v1008, %v1006
    %v1010 = vmul.f32 %v1009, %v1008
    %v1011 = vmul.f32 0.5, %v1010
    %v1012 = vsub.f32 1.5, %v1011
    %v1013 = vmul.f32 %v1008, %v1012
    %vm1014 = vweird.f32 %v1006
    %vm1015 = vweird.f32 %v1008
    %vm1016 = vmor %vm1014, %vm1015
    %v1017 = vsel %vm1016, %v1008, %v1013
    %v1018 = vrsqrt.pop %v1007
    %v1019 = vmul.f32 %v1018, %v1007
    %v1020 = vmul.f32 %v1019, %v1018
    %v1021 = vmul.f32 0.5, %v1020
    %v1022 = vsub.f32 1.5, %v1021
    %v1023 = vmul.f32 %v1018, %v1022
    %vm1024 = vweird.f32 %v1007
    %vm1025 = vweird.f32 %v1018
    %vm1026 = vmor %vm1024, %vm1025
    %v1027 = vsel %vm1026, %v1018, %v1023
    %v1028 = vmul.f32 %v994, %v1017
    %v1029 = vmul.f32 %v995, %v1027
    %v1030 = vld [vmem:[%s15] sm:$0x1]
    %v1032 = vperm.slane %v1030, 0
    %v1034 = vmul.f32 %v1028, %v1032
    %v1035 = vmul.f32 %v1029, %v1032
    %v1036 = vld [vmem:[%s16] sm:$0x1]
    %v1038 = vperm.slane %v1036, 0
    %v1040 = vadd.f32 %v1034, %v1038
    %v1041 = vadd.f32 %v1035, %v1038
    %1042 = vst.msk [vmem:[#allocation10] sm:$0xff] %vm134, %v1040
    %1043 = vst.msk [vmem:[#allocation10 + $0x8] sm:$0xff] %vm134, %v1041
    // Predicated region
    $region86: #{tpu_custom_call.1} parent=1 // pred_check
      _
    $region87: #{tpu_custom_call.1} parent=1 // pred_check_branch
      %1045 = sbr.rel (0) target = $region89
    $region88: #{tpu_custom_call.1} parent=1 // pred_region
      %1047 = vsyncadd [#allocation4], 0
      %s1048 = sshll.u32 [#allocation10], 4
      %s1049 = int_to_ptr.vmem [resolvable:$true] %s1048
      %s1050 = sshll.u32 %s17, 4
      %s1051 = int_to_ptr.hbm [resolvable:$true] %s1050
      %1056 = dma.vmem_to_hbm [thread:$0]  %s1049, 256, %s1051, [#allocation4], 128, 128, 8
    $region89: #{tpu_custom_call.1} parent=1 // pred_fallthru
      _
    // Predicated region
    $region90: #{tpu_custom_call.1} parent=1 // pred_check
      _
    $region91: #{tpu_custom_call.1} parent=1 // pred_check_branch
      %1058 = sbr.rel (0) target = $region93
    $region92: #{tpu_custom_call.1} parent=1 // pred_region
      %1060 = dma.done [#allocation4], 256
    $region93: #{tpu_custom_call.1} parent=1 // pred_fallthru
      _
    %1061 = vsyncpa [#allocation3], 1
    %1062 = vsyncpa [#allocation6], 1
    %1063 = vsyncpa [#allocation9], 1
    %1064 = vsyncpa [#allocation4], 1

</llo_original>
